<compile_context>
chip_gen: v5e
topology: v5e:2x2
jax: 0.10.0
libtpu: 0.0.40
codegen_flags: <defaults>
</compile_context>

<pallas_src>
import functools

import jax
import jax.numpy as jnp
from jax.experimental import pallas as pl
from jax.experimental.pallas import tpu as pltpu


def mlp_anil_kernel(x_ref, w1_ref, b1_ref, w2_ref, b2_ref, w3_ref, b3_ref, o_ref):
    """One batch tile: three MXU matmuls (bf16 operands, f32 accumulate) + bias + ReLU."""
    bf16 = jnp.bfloat16
    x = x_ref[...].astype(bf16)                          # f32 tile from HBM, cast on VPU
    h1 = jnp.dot(x, w1_ref[...], preferred_element_type=jnp.float32) + b1_ref[...]
    h1 = jnp.maximum(h1, 0.0)
    h2 = jnp.dot(h1.astype(bf16), w2_ref[...],
                 preferred_element_type=jnp.float32) + b2_ref[...]
    h2 = jnp.maximum(h2, 0.0)
    out = jnp.dot(h2.astype(bf16), w3_ref[...],
                  preferred_element_type=jnp.float32) + b3_ref[...]
    o_ref[...] = out.astype(o_ref.dtype)                 # narrow [tb, out_dim] store


@functools.partial(jax.jit, static_argnames=("block_batch",))
def mlp_anil_forward(x, params, *, block_batch=4096):
    """x: [B, input_dim] float32; params: dict of f32 weights/biases."""
    w1, b1 = params["w1"], params["b1"]
    w2, b2 = params["w2"], params["b2"]
    w3, b3 = params["w3"], params["b3"]

    B, in_dim = x.shape
    out_dim = w3.shape[1]

    # Tiny resident operands: bf16 for the MXU, f32 biases.
    w1b, w2b, w3b = (w.astype(jnp.bfloat16) for w in (w1, w2, w3))
    b1f, b2f, b3f = (b.astype(jnp.float32) for b in (b1, b2, b3))

    # Batch tile: whole batch when it fits (block == full dim, no alignment needed),
    # otherwise a multiple-of-16 tile; the ragged last block is masked by Pallas.
    if B <= block_batch:
        tb = B
    else:
        tb = max(16, (block_batch // 16) * 16)
    grid = (pl.cdiv(B, tb),)

    resident = lambda shape: pl.BlockSpec(shape, lambda i: (0, 0))  # stays in VMEM

    out = pl.pallas_call(
        mlp_anil_kernel,
        out_shape=jax.ShapeDtypeStruct((B, out_dim), jnp.float32),
        grid=grid,
        in_specs=[
            pl.BlockSpec((tb, in_dim), lambda i: (i, 0)),   # x streams by batch tile (f32, read once)
            resident(w1b.shape), resident(b1f.shape),
            resident(w2b.shape), resident(b2f.shape),
            resident(w3b.shape), resident(b3f.shape),
        ],
        out_specs=pl.BlockSpec((tb, out_dim), lambda i: (i, 0)),
        compiler_params=pltpu.CompilerParams(
            dimension_semantics=("parallel",),              # megacore sharding on v7x
        ),
    )(x, w1b, b1f, w2b, b2f, w3b, b3f)

    # TODO(synk): for multi-task ANIL, pack several tasks' hidden/head weights along the
    # output-feature axis so the matmul N dim fills the MXU (only matters once compute-bound).
    return out


def init_params(key, input_dim, hidden_dim=32, output_dim=1):
    """Deterministic synthetic init (matches nn.Linear shapes, stored transposed)."""
    ks = jax.random.split(key, 6)

    def lin(kw, kb, fan_in, fan_out):
        bound = 1.0 / jnp.sqrt(fan_in)
        w = jax.random.uniform(kw, (fan_in, fan_out), jnp.float32, -bound, bound)
        b = jax.random.uniform(kb, (1, fan_out), jnp.float32, -bound, bound)
        return w, b

    w1, b1 = lin(ks[0], ks[1], input_dim, hidden_dim)
    w2, b2 = lin(ks[2], ks[3], hidden_dim, hidden_dim)
    w3, b3 = lin(ks[4], ks[5], hidden_dim, output_dim)
    return {"w1": w1, "b1": b1, "w2": w2, "b2": b2, "w3": w3, "b3": b3}


def reference_forward_f32(x, p):
    h1 = jnp.maximum(x @ p["w1"] + p["b1"], 0.0)
    h2 = jnp.maximum(h1 @ p["w2"] + p["b2"], 0.0)
    return h2 @ p["w3"] + p["b3"]


def reference_forward_bf16(x, p):
    """Mirrors the kernel's bf16-operand / f32-accumulate arithmetic."""
    bf = jnp.bfloat16
    h1 = jnp.dot(x.astype(bf), p["w1"].astype(bf),
                 preferred_element_type=jnp.float32) + p["b1"]
    h1 = jnp.maximum(h1, 0.0)
    h2 = jnp.dot(h1.astype(bf), p["w2"].astype(bf),
                 preferred_element_type=jnp.float32) + p["b2"]
    h2 = jnp.maximum(h2, 0.0)
    return jnp.dot(h2.astype(bf), p["w3"].astype(bf),
                   preferred_element_type=jnp.float32) + p["b3"]


if __name__ == "__main__":
    key = jax.random.PRNGKey(0)
    k_x, k_p, k_x2 = jax.random.split(key, 3)

    batch, input_dim, hidden_dim, output_dim = 8, 16, 32, 1
    x = jax.random.normal(k_x, (batch, input_dim), jnp.float32)
    params = init_params(k_p, input_dim, hidden_dim, output_dim)

    out = jax.block_until_ready(mlp_anil_forward(x, params))
    assert out.shape == (batch, output_dim)

    # Tight check against a reference using identical bf16/f32 arithmetic.
    ref_bf16 = reference_forward_bf16(x, params)
    assert jnp.allclose(out, ref_bf16, atol=1e-4, rtol=1e-4), (
        float(jnp.max(jnp.abs(out - ref_bf16))))

    # Loose sanity check against the full-f32 PyTorch-equivalent reference.
    ref_f32 = reference_forward_f32(x, params)
    assert jnp.allclose(out, ref_f32, atol=3e-2, rtol=3e-2), (
        float(jnp.max(jnp.abs(out - ref_f32))))

    # Exercise the streamed multi-step grid with a ragged last block (no jnp.pad path).
    x2 = jax.random.normal(k_x2, (100, input_dim), jnp.float32)
    out2 = jax.block_until_ready(mlp_anil_forward(x2, params, block_batch=32))
    assert out2.shape == (100, output_dim)
    ref2 = reference_forward_bf16(x2, params)
    assert jnp.allclose(out2, ref2, atol=1e-4, rtol=1e-4), (
        float(jnp.max(jnp.abs(out2 - ref2))))

    print("KERNEL_OK")
</pallas_src>

<mosaic_0001>
module attributes {stable_mosaic.version = 11 : i64} {
  func.func @mlp_anil_kernel(%arg0: i32, %arg1: memref<8x16xf32, #tpu.memory_space<vmem>>, %arg2: memref<16x32xbf16, #tpu.memory_space<vmem>>, %arg3: memref<1x32xf32, #tpu.memory_space<vmem>>, %arg4: memref<32x32xbf16, #tpu.memory_space<vmem>>, %arg5: memref<1x32xf32, #tpu.memory_space<vmem>>, %arg6: memref<32x1xbf16, #tpu.memory_space<vmem>>, %arg7: memref<1x1xf32, #tpu.memory_space<vmem>>, %arg8: memref<8x1xf32, #tpu.memory_space<vmem>>) attributes {dimension_semantics = [#tpu.dimension_semantics<parallel>], iteration_bounds = array<i64: 1>, scalar_prefetch = 0 : i64, scratch_operands = 0 : i64, tpu.core_type = #tpu.core_type<tc>, window_params = [{transform_indices = @transform_0, window_bounds = array<i64: 8, 16>}, {pipeline_mode = #tpu.pipeline_mode<synchronous>, transform_indices = @transform_1, window_bounds = array<i64: 16, 32>}, {pipeline_mode = #tpu.pipeline_mode<synchronous>, transform_indices = @transform_2, window_bounds = array<i64: 1, 32>}, {pipeline_mode = #tpu.pipeline_mode<synchronous>, transform_indices = @transform_3, window_bounds = array<i64: 32, 32>}, {pipeline_mode = #tpu.pipeline_mode<synchronous>, transform_indices = @transform_4, window_bounds = array<i64: 1, 32>}, {pipeline_mode = #tpu.pipeline_mode<synchronous>, transform_indices = @transform_5, window_bounds = array<i64: 32, 1>}, {pipeline_mode = #tpu.pipeline_mode<synchronous>, transform_indices = @transform_6, window_bounds = array<i64: 1, 1>}, {transform_indices = @transform_7, window_bounds = array<i64: 8, 1>}]} {
    %c0 = arith.constant 0 : index
    %c0_0 = arith.constant 0 : index
    %0 = vector.load %arg1[%c0, %c0_0] : memref<8x16xf32, #tpu.memory_space<vmem>>, vector<8x16xf32>
    %1 = arith.truncf %0 : vector<8x16xf32> to vector<8x16xbf16>
    %c0_1 = arith.constant 0 : index
    %c0_2 = arith.constant 0 : index
    %2 = vector.load %arg2[%c0_1, %c0_2] : memref<16x32xbf16, #tpu.memory_space<vmem>>, vector<16x32xbf16>
    %cst = arith.constant dense<0.000000e+00> : vector<8x32xf32>
    %3 = tpu.matmul %1, %2, %cst {dimension_numbers = #tpu.dot_dimension_numbers<[1], [0], [0], [1], [0, 0, 1, 1], [], []>} : vector<8x16xbf16>, vector<16x32xbf16>, vector<8x32xf32> -> vector<8x32xf32>
    %c0_3 = arith.constant 0 : index
    %c0_4 = arith.constant 0 : index
    %4 = vector.load %arg3[%c0_3, %c0_4] : memref<1x32xf32, #tpu.memory_space<vmem>>, vector<1x32xf32>
    %5 = vector.broadcast %4 : vector<1x32xf32> to vector<8x32xf32>
    %6 = arith.addf %3, %5 : vector<8x32xf32>
    %cst_5 = arith.constant 0.000000e+00 : f32
    %7 = vector.broadcast %cst_5 : f32 to vector<8x32xf32>
    %8 = arith.maximumf %6, %7 : vector<8x32xf32>
    %9 = arith.truncf %8 : vector<8x32xf32> to vector<8x32xbf16>
    %c0_6 = arith.constant 0 : index
    %c0_7 = arith.constant 0 : index
    %10 = vector.load %arg4[%c0_6, %c0_7] : memref<32x32xbf16, #tpu.memory_space<vmem>>, vector<32x32xbf16>
    %cst_8 = arith.constant dense<0.000000e+00> : vector<8x32xf32>
    %11 = tpu.matmul %9, %10, %cst_8 {dimension_numbers = #tpu.dot_dimension_numbers<[1], [0], [0], [1], [0, 0, 1, 1], [], []>} : vector<8x32xbf16>, vector<32x32xbf16>, vector<8x32xf32> -> vector<8x32xf32>
    %c0_9 = arith.constant 0 : index
    %c0_10 = arith.constant 0 : index
    %12 = vector.load %arg5[%c0_9, %c0_10] : memref<1x32xf32, #tpu.memory_space<vmem>>, vector<1x32xf32>
    %13 = vector.broadcast %12 : vector<1x32xf32> to vector<8x32xf32>
    %14 = arith.addf %11, %13 : vector<8x32xf32>
    %cst_11 = arith.constant 0.000000e+00 : f32
    %15 = vector.broadcast %cst_11 : f32 to vector<8x32xf32>
    %16 = arith.maximumf %14, %15 : vector<8x32xf32>
    %17 = arith.truncf %16 : vector<8x32xf32> to vector<8x32xbf16>
    %c0_12 = arith.constant 0 : index
    %c0_13 = arith.constant 0 : index
    %18 = vector.load %arg6[%c0_12, %c0_13] : memref<32x1xbf16, #tpu.memory_space<vmem>>, vector<32x1xbf16>
    %cst_14 = arith.constant dense<0.000000e+00> : vector<8x1xf32>
    %19 = tpu.matmul %17, %18, %cst_14 {dimension_numbers = #tpu.dot_dimension_numbers<[1], [0], [0], [1], [0, 0, 1, 1], [], []>} : vector<8x32xbf16>, vector<32x1xbf16>, vector<8x1xf32> -> vector<8x1xf32>
    %c0_15 = arith.constant 0 : index
    %c0_16 = arith.constant 0 : index
    %20 = vector.load %arg7[%c0_15, %c0_16] : memref<1x1xf32, #tpu.memory_space<vmem>>, vector<1x1xf32>
    %21 = vector.broadcast %20 : vector<1x1xf32> to vector<8x1xf32>
    %22 = arith.addf %19, %21 : vector<8x1xf32>
    %c0_17 = arith.constant 0 : index
    %c0_18 = arith.constant 0 : index
    %23 = vector.load %arg8[%c0_17, %c0_18] : memref<8x1xf32, #tpu.memory_space<vmem>>, vector<8x1xf32>
    tpu.vector_store %arg8[%c0_17, %c0_18], %22 {strides = array<i32>} : memref<8x1xf32, #tpu.memory_space<vmem>>, vector<8x1xf32>,
    return
  }
  func.func @transform_0(%arg0: i32) -> (i32, i32) {
    %c0_i32 = arith.constant 0 : i32
    %c0_i32_0 = arith.constant 0 : i32
    return %arg0, %c0_i32 : i32, i32
  }
  func.func @transform_1(%arg0: i32) -> (i32, i32) {
    %c0_i32 = arith.constant 0 : i32
    %c0_i32_0 = arith.constant 0 : i32
    %c0_i32_1 = arith.constant 0 : i32
    return %c0_i32, %c0_i32_0 : i32, i32
  }
  func.func @transform_2(%arg0: i32) -> (i32, i32) {
    %c0_i32 = arith.constant 0 : i32
    %c0_i32_0 = arith.constant 0 : i32
    %c0_i32_1 = arith.constant 0 : i32
    return %c0_i32, %c0_i32_0 : i32, i32
  }
  func.func @transform_3(%arg0: i32) -> (i32, i32) {
    %c0_i32 = arith.constant 0 : i32
    %c0_i32_0 = arith.constant 0 : i32
    %c0_i32_1 = arith.constant 0 : i32
    return %c0_i32, %c0_i32_0 : i32, i32
  }
  func.func @transform_4(%arg0: i32) -> (i32, i32) {
    %c0_i32 = arith.constant 0 : i32
    %c0_i32_0 = arith.constant 0 : i32
    %c0_i32_1 = arith.constant 0 : i32
    return %c0_i32, %c0_i32_0 : i32, i32
  }
  func.func @transform_5(%arg0: i32) -> (i32, i32) {
    %c0_i32 = arith.constant 0 : i32
    %c0_i32_0 = arith.constant 0 : i32
    %c0_i32_1 = arith.constant 0 : i32
    return %c0_i32, %c0_i32_0 : i32, i32
  }
  func.func @transform_6(%arg0: i32) -> (i32, i32) {
    %c0_i32 = arith.constant 0 : i32
    %c0_i32_0 = arith.constant 0 : i32
    %c0_i32_1 = arith.constant 0 : i32
    return %c0_i32, %c0_i32_0 : i32, i32
  }
  func.func @transform_7(%arg0: i32) -> (i32, i32) {
    %c0_i32 = arith.constant 0 : i32
    %c0_i32_0 = arith.constant 0 : i32
    return %arg0, %c0_i32 : i32, i32
  }
}

</mosaic_0001>

<llo_original>
// kernel: mlp_anil_forward.1
$region0: #{mlp_anil_forward.1}
  #allocation0 [shape = 'u32[]', space=smem, size = 0x4, offset = 0x4, fixed_abs, tag = 'smem constant byte address 0x4 - core index']
  #allocation1 [shape = 'u32[72,128]{1,0:T(1,128)}', space=vmem, size = 0x9000, scoped, tag = 'internal scratch']
  #allocation2 [shape = 'f32[1,1]{1,0:T(1,128)S(1)}', space=vmem, size = 0x200, scoped, tag = 'scoped memory for mlp_anil_forward.1']
  %s0 = inlined_call_operand.vmem [shape: f32[8,16], index: 0, kind: input, shape index: {}]
  %s1 = inlined_call_operand.vmem [shape: bf16[16,32], index: 1, kind: input, shape index: {}]
  %s2 = inlined_call_operand.vmem [shape: f32[1,32], index: 2, kind: input, shape index: {}]
  %s3 = inlined_call_operand.vmem [shape: bf16[32,32], index: 3, kind: input, shape index: {}]
  %s4 = inlined_call_operand.vmem [shape: f32[1,32], index: 4, kind: input, shape index: {}]
  %s5 = inlined_call_operand.vmem [shape: bf16[32,1], index: 5, kind: input, shape index: {}]
  %s6 = inlined_call_operand.<no memory space> [shape: f32[1,1], index: 6, kind: input, shape index: {}]
  %s7 = inlined_call_operand.vmem [shape: f32[8,1], index: 7, kind: output, shape index: {}]
  %s8 = sld [smem:[#allocation0]]
  $region38: #{mlp_anil_forward.1} parent=0
    _
  %s10 = ssub.s32 1, %s8
  %s11 = scalar_select 0, %s10, %s8
  %v12 = vstv %s6
  %13 = vst [vmem:[#allocation2] sm:$0x1] %v12
  // Predicated region
  $region2: #{mlp_anil_forward.1} parent=0 // pred_check
    _
  $region3: #{mlp_anil_forward.1} parent=0 // pred_check_branch
    %15 = sbr.rel (0) target = $region5
  $region4: #{mlp_anil_forward.1} parent=0 // pred_region
    _
  $region5: #{mlp_anil_forward.1} parent=0 // pred_fallthru
    _
  // Predicated region
  $region6: #{mlp_anil_forward.1} parent=0 // pred_check
    _
  $region7: #{mlp_anil_forward.1} parent=0 // pred_check_branch
    %17 = sbr.rel (0) target = $region9
  $region8: #{mlp_anil_forward.1} parent=0 // pred_region
    _
  $region9: #{mlp_anil_forward.1} parent=0 // pred_fallthru
    _
  // Predicated region
  $region10: #{mlp_anil_forward.1} parent=0 // pred_check
    _
  $region11: #{mlp_anil_forward.1} parent=0 // pred_check_branch
    %19 = sbr.rel (0) target = $region13
  $region12: #{mlp_anil_forward.1} parent=0 // pred_region
    _
  $region13: #{mlp_anil_forward.1} parent=0 // pred_fallthru
    _
  // Predicated region
  $region14: #{mlp_anil_forward.1} parent=0 // pred_check
    _
  $region15: #{mlp_anil_forward.1} parent=0 // pred_check_branch
    %21 = sbr.rel (0) target = $region17
  $region16: #{mlp_anil_forward.1} parent=0 // pred_region
    _
  $region17: #{mlp_anil_forward.1} parent=0 // pred_fallthru
    _
  // Predicated region
  $region18: #{mlp_anil_forward.1} parent=0 // pred_check
    _
  $region19: #{mlp_anil_forward.1} parent=0 // pred_check_branch
    %23 = sbr.rel (0) target = $region21
  $region20: #{mlp_anil_forward.1} parent=0 // pred_region
    _
  $region21: #{mlp_anil_forward.1} parent=0 // pred_fallthru
    _
  // Predicated region
  $region22: #{mlp_anil_forward.1} parent=0 // pred_check
    _
  $region23: #{mlp_anil_forward.1} parent=0 // pred_check_branch
    %25 = sbr.rel (0) target = $region25
  $region24: #{mlp_anil_forward.1} parent=0 // pred_region
    _
  $region25: #{mlp_anil_forward.1} parent=0 // pred_fallthru
    _
  // Predicated region
  $region26: #{mlp_anil_forward.1} parent=0 // pred_check
    _
  $region27: #{mlp_anil_forward.1} parent=0 // pred_check_branch
    %27 = sbr.rel (0) target = $region29
  $region28: #{mlp_anil_forward.1} parent=0 // pred_region
    _
  $region29: #{mlp_anil_forward.1} parent=0 // pred_fallthru
    _
  %v29 = vld [vmem:[%s0] sm:$0xff]
  %v30 = vpack.c.bf16 %v29, %v29
  %v31 = vld [vmem:[%s1] sm:$0xf]
  %v32 = vld [vmem:[%s1 + $0x4] sm:$0xf]
  %v33 = vld [vmem:[%s2] sm:$0x1]
  %v35 = vperm.slane %v33, 0
  %v39 = vunpack.c.l.b16 %v31
  %v40 = vunpack.c.l.b16 %v32
  %v41 = vpack.c.b16 %v40, %v39
  %vm43 = vcmask 130048
  %v45 = vsel %vm43, %v30, 0
  %47 = vmatpush.bf16.msra.mxu0 0
  %48 = vmatpush.bf16.msra.mxu0 0
  %49 = vmatpush.bf16.msra.mxu0 0
  %50 = vmatpush.bf16.msra.mxu0 0
  %51 = vmatpush.bf16.msra.mxu0 0
  %52 = vmatpush.bf16.msra.mxu0 0
  %53 = vmatpush.bf16.msra.mxu0 0
  %54 = vmatpush.bf16.msra.mxu0 %v41
  %55 = vmatmul.bf16.gmra.mxu0 %v45
  %v56 = vpop.f32.mrf.mxu0
  %v57 = vadd.f32 %v35, %v56
  %v58 = vpop.f32.mrf.mxu0
  %59 = vdwg.mxu0
  %v60 = vmax.f32 %v57, 0.0
  %v61 = vpack.c.bf16 %v60, %v60
  %v62 = vld [vmem:[%s3] sm:$0xf]
  %v63 = vld [vmem:[%s3 + $0x4] sm:$0xf]
  %v64 = vld [vmem:[%s3 + $0x8] sm:$0xf]
  %v65 = vld [vmem:[%s3 + $0xc] sm:$0xf]
  %v66 = vld [vmem:[%s4] sm:$0x1]
  %v68 = vperm.slane %v66, 0
  %v74 = vunpack.c.l.b16 %v62
  %v75 = vunpack.c.l.b16 %v63
  %v76 = vunpack.c.l.b16 %v64
  %v77 = vunpack.c.l.b16 %v65
  %v78 = vpack.c.b16 %v75, %v74
  %v79 = vpack.c.b16 %v77, %v76
  %vm82 = vcmask 261120
  %v84 = vsel %vm82, %v61, 0
  %86 = vmatpush.bf16.msra.mxu0 0
  %87 = vmatpush.bf16.msra.mxu0 0
  %88 = vmatpush.bf16.msra.mxu0 0
  %89 = vmatpush.bf16.msra.mxu0 0
  %90 = vmatpush.bf16.msra.mxu0 0
  %91 = vmatpush.bf16.msra.mxu0 0
  %92 = vmatpush.bf16.msra.mxu0 %v79
  %93 = vmatpush.bf16.msra.mxu0 %v78
  %94 = vmatmul.bf16.gmra.mxu0 %v84
  %v95 = vpop.f32.mrf.mxu0
  %v96 = vadd.f32 %v68, %v95
  %v97 = vpop.f32.mrf.mxu0
  %98 = vdwg.mxu0
  %v99 = vmax.f32 %v96, 0.0
  %v100 = vpack.c.bf16 %v99, %v99
  %v101 = vld [vmem:[%s5] sm:$0xf]
  %v102 = vld [vmem:[%s5 + $0x4] sm:$0xf]
  %v103 = vld [vmem:[%s5 + $0x8] sm:$0xf]
  %v104 = vld [vmem:[%s5 + $0xc] sm:$0xf]
  %v105 = vld [vmem:[#allocation2] sm:$0x1]
  %v107 = vperm.slane %v105, 0
  %v113 = vunpack.c.l.b16 %v101
  %v114 = vunpack.c.l.b16 %v102
  %v115 = vunpack.c.l.b16 %v103
  %v116 = vunpack.c.l.b16 %v104
  %v117 = vpack.c.b16 %v114, %v113
  %v118 = vpack.c.b16 %v116, %v115
  %v122 = vsel %vm82, %v100, 0
  %124 = vmatpush.bf16.msra.mxu0 0
  %125 = vmatpush.bf16.msra.mxu0 0
  %126 = vmatpush.bf16.msra.mxu0 0
  %127 = vmatpush.bf16.msra.mxu0 0
  %128 = vmatpush.bf16.msra.mxu0 0
  %129 = vmatpush.bf16.msra.mxu0 0
  %130 = vmatpush.bf16.msra.mxu0 %v118
  %131 = vmatpush.bf16.msra.mxu0 %v117
  %132 = vmatmul.bf16.gmra.mxu0 %v122
  %v133 = vpop.f32.mrf.mxu0
  %v134 = vadd.f32 %v107, %v133
  %v135 = vpop.f32.mrf.mxu0
  %136 = vdwg.mxu0
  %vm137 = vcmask 7168
  %138 = vst.msk [vmem:[%s7] sm:$0xff] %vm137, %v134
  // Predicated region
  $region30: #{mlp_anil_forward.1} parent=0 // pred_check
    _
  $region31: #{mlp_anil_forward.1} parent=0 // pred_check_branch
    %140 = sbr.rel (0) target = $region33
  $region32: #{mlp_anil_forward.1} parent=0 // pred_region
    _
  $region33: #{mlp_anil_forward.1} parent=0 // pred_fallthru
    _
  // Predicated region
  $region34: #{mlp_anil_forward.1} parent=0 // pred_check
    _
  $region35: #{mlp_anil_forward.1} parent=0 // pred_check_branch
    %142 = sbr.rel (0) target = $region37
  $region36: #{mlp_anil_forward.1} parent=0 // pred_region
    _
  $region37: #{mlp_anil_forward.1} parent=0 // pred_fallthru
    _

</llo_original>
